<compile_context>
chip_gen: v7x
topology: tpu7x:2x2x1
jax: 0.10.0
libtpu: 0.0.40
codegen_flags: <defaults>
</compile_context>

<pallas_src>
import functools

import jax
import jax.numpy as jnp
from jax import lax
from jax.experimental import pallas as pl
from jax.experimental.pallas import tpu as pltpu


def _round_up(a, b):
    return (a + b - 1) // b * b


def _vmem_limit_bytes():
    """Generation-aware VMEM scoped limit (~100 MiB v5e/v6e, ~52 MiB v7x)."""
    cap = 64 * 1024 * 1024
    try:
        info = pltpu.get_tpu_info()
        cap = int(getattr(info, "vmem_capacity_bytes", cap))
    except Exception:
        pass
    return max(32 * 1024 * 1024, min(cap - 12 * 1024 * 1024, 100 * 1024 * 1024))


def _tile_footprint_bytes(tm, tk, d_in, x_bytes, c_bytes, out_bytes):
    """Rough per-step VMEM footprint (double-buffered inputs/outputs + scratch)."""
    lane = 128

    def pad(n, mult):
        return _round_up(max(n, mult), mult)

    x_tile = 2 * tm * pad(d_in, lane) * x_bytes
    w1_tile = 2 * pad(d_in, 8) * pad(tk, lane) * c_bytes
    w2_tile = 2 * pad(tk, 8) * pad(d_in, lane) * c_bytes
    b1_tile = 2 * 8 * pad(tk, lane) * 4
    b2_tile = 2 * 8 * pad(d_in, lane) * 4
    out_tile = 2 * tm * pad(d_in, lane) * out_bytes
    acc = tm * pad(d_in, lane) * 4
    h_tmp = 2 * tm * pad(tk, lane) * 4  # fc1 result + gelu temporaries
    return x_tile + w1_tile + w2_tile + b1_tile + b2_tile + out_tile + acc + h_tmp


def _plan_tiles(m, d_in, mlp_dim, x_bytes, c_bytes, out_bytes, sublane, tm_target,
                budget):
    """Pick (tm, tk): biggest row tile / hidden chunk that fits the VMEM budget."""
    # Candidate hidden-chunk sizes: resident (mlp_dim) first, then the largest
    # multiple-of-128 divisors of mlp_dim (so no ragged K tile is ever needed).
    tk_cands = [mlp_dim]
    t = (mlp_dim // 128) * 128
    while t >= 128:
        if t != mlp_dim and mlp_dim % t == 0:
            tk_cands.append(t)
        t -= 128

    tm = min(_round_up(tm_target, sublane), _round_up(m, sublane))
    while True:
        for tk in tk_cands:
            if _tile_footprint_bytes(tm, tk, d_in, x_bytes, c_bytes, out_bytes) <= budget:
                return tm, tk
        if tm <= sublane:
            return tm, tk_cands[-1]  # best effort
        tm = _round_up(max(sublane, tm // 2), sublane)


def _mlp_block_kernel(x_ref, w1_ref, b1_ref, w2_ref, b2_ref, o_ref, acc_ref):
    # x:   (TM, D_in)  [input dtype]    w1t: (D_in, TK)  [compute dtype]
    # b1:  (1, TK)     [f32]            w2t: (TK, D_in)  [compute dtype]
    # b2:  (1, D_in)   [f32]            o:   (TM, D_in)  acc: (TM, D_in) f32
    k = pl.program_id(1)

    @pl.when(k == 0)
    def _init():
        acc_ref[...] = jnp.zeros_like(acc_ref)

    # Cast activations to the MXU compute dtype in-kernel (no wrapper HBM pass).
    x = x_ref[...].astype(w1_ref.dtype)

    # fc1 partial over this hidden chunk: (TM, D_in) @ (D_in, TK) -> (TM, TK).
    h = jnp.dot(x, w1_ref[...], preferred_element_type=jnp.float32)
    h = h + b1_ref[...]

    # Exact GELU (matches torch.nn.GELU(approximate='none')); erf -> EUP slot.
    h = 0.5 * h * (1.0 + lax.erf(h * jnp.float32(0.7071067811865476)))

    # fc2 partial: (TM, TK) @ (TK, D_in) -> (TM, D_in); accumulate in f32.
    acc_ref[...] += jnp.dot(h.astype(w2_ref.dtype), w2_ref[...],
                            preferred_element_type=jnp.float32)

    @pl.when(k == pl.num_programs(1) - 1)
    def _finalize():
        o_ref[...] = (acc_ref[...] + b2_ref[...]).astype(o_ref.dtype)


@functools.partial(
    jax.jit, static_argnames=("compute_dtype", "tm_target", "tk_override"))
def mlp_block(x, w1, b1, w2, b2, *, compute_dtype=jnp.bfloat16, tm_target=512,
              tk_override=None):
    """Fused MLP block: fc2(gelu(fc1(x))).

    x:  (..., input_dim)
    w1: (mlp_dim, input_dim), b1: (mlp_dim,)   -- PyTorch (out, in) layout
    w2: (input_dim, mlp_dim), b2: (input_dim,)
    """
    *lead, d_in = x.shape
    mlp_dim, d_in_w = w1.shape
    assert d_in_w == d_in and w2.shape == (d_in, mlp_dim)
    m = 1
    for s in lead:
        m *= s
    m = max(m, 1)

    out_dtype = x.dtype
    x_bytes = jnp.dtype(x.dtype).itemsize
    c_bytes = jnp.dtype(compute_dtype).itemsize
    out_bytes = jnp.dtype(out_dtype).itemsize
    sublane = {4: 8, 2: 16, 1: 32}.get(c_bytes, 8)

    vmem_limit = _vmem_limit_bytes()
    budget = int(vmem_limit * 0.7)
    tm, tk = _plan_tiles(m, d_in, mlp_dim, x_bytes, c_bytes, out_bytes, sublane,
                         tm_target, budget)
    if tk_override is not None:
        if (mlp_dim % tk_override) or not (tk_override % 128 == 0
                                           or tk_override == mlp_dim):
            raise ValueError(
                "tk_override must divide mlp_dim and be a multiple of 128 "
                "(or equal mlp_dim)")
        tk = tk_override

    m_tiles = -(-m // tm)            # ragged last row tile is masked by Pallas
    k_tiles = mlp_dim // tk
    grid = (m_tiles, k_tiles)

    # One-time HBM-side transpose fused with the compute-dtype cast; both
    # in-kernel matmuls are then canonical [M,K]x[K,N] (no per-step re-layout).
    x2d = x.reshape(m, d_in)                       # metadata only, no cast pass
    w1t = w1.T.astype(compute_dtype)               # (d_in, mlp_dim)
    w2t = w2.T.astype(compute_dtype)               # (mlp_dim, d_in)
    b1_2d = b1.reshape(1, mlp_dim).astype(jnp.float32)
    b2_2d = b2.reshape(1, d_in).astype(jnp.float32)

    cost = pl.CostEstimate(
        flops=4 * m * d_in * mlp_dim,
        transcendentals=m * mlp_dim,
        bytes_accessed=(
            m * d_in * x_bytes                              # x read once
            + m_tiles * 2 * d_in * mlp_dim * c_bytes        # weights per row tile
            + m_tiles * (mlp_dim + d_in) * 4                # biases
            + m * d_in * out_bytes                          # output
        ),
    )

    out2d = pl.pallas_call(
        _mlp_block_kernel,
        out_shape=jax.ShapeDtypeStruct((m, d_in), out_dtype),
        grid_spec=pltpu.PrefetchScalarGridSpec(
            num_scalar_prefetch=0,
            grid=grid,
            in_specs=[
                # x row tile: resident across the k axis, streamed over rows.
                pl.BlockSpec((tm, d_in), lambda i, k: (i, 0)),
                # w1^T hidden chunk (streamed / double-buffered over k).
                pl.BlockSpec((d_in, tk), lambda i, k: (0, k)),
                # b1 hidden chunk.
                pl.BlockSpec((1, tk), lambda i, k: (0, k)),
                # w2^T hidden chunk.
                pl.BlockSpec((tk, d_in), lambda i, k: (k, 0)),
                # b2: constant index map -> VMEM resident.
                pl.BlockSpec((1, d_in), lambda i, k: (0, 0)),
            ],
            out_specs=pl.BlockSpec((tm, d_in), lambda i, k: (i, 0)),
            scratch_shapes=[pltpu.VMEM((tm, d_in), jnp.float32)],
        ),
        compiler_params=pltpu.CompilerParams(
            dimension_semantics=("parallel", "arbitrary"),
            vmem_limit_bytes=vmem_limit,
        ),
        cost_estimate=cost,
    )(x2d, w1t, b1_2d, w2t, b2_2d)

    return out2d.reshape(*lead, d_in)


if __name__ == "__main__":
    # Small but lane-dense shapes (feature dims are multiples of 128 so stores
    # are unmasked and the MXU runs at full column utilization).
    batch, seq, input_dim, mlp_dim = 2, 8, 128, 256

    key = jax.random.PRNGKey(0)
    kx, kw1, kb1, kw2, kb2 = jax.random.split(key, 5)

    x = jax.random.normal(kx, (batch, seq, input_dim), dtype=jnp.float32)

    # PyTorch Linear shapes: weight (out, in), bias (out,).
    w1 = jax.random.normal(kw1, (mlp_dim, input_dim), dtype=jnp.float32) * 0.05
    b1 = jax.random.normal(kb1, (mlp_dim,), dtype=jnp.float32) * 0.05
    w2 = jax.random.normal(kw2, (input_dim, mlp_dim), dtype=jnp.float32) * 0.05
    b2 = jax.random.normal(kb2, (input_dim,), dtype=jnp.float32) * 0.05

    # Reference in plain JAX (exact GELU).
    def ref(xx):
        h = xx @ w1.T + b1
        h = 0.5 * h * (1.0 + lax.erf(h / jnp.sqrt(2.0)))
        return h @ w2.T + b2

    ref_out = ref(x)

    # f32 path, weights fully resident (k_tiles == 1): exact-precision check.
    out_f32 = mlp_block(x, w1, b1, w2, b2, compute_dtype=jnp.float32)
    jax.block_until_ready(out_f32)
    assert out_f32.shape == (batch, seq, input_dim)
    assert jnp.allclose(out_f32, ref_out, atol=1e-5, rtol=1e-5)

    # f32 path with forced mlp_dim streaming (k_tiles == 2): exercises the
    # accumulator init / finalize logic on-device.
    out_stream = mlp_block(x, w1, b1, w2, b2, compute_dtype=jnp.float32,
                           tk_override=128)
    jax.block_until_ready(out_stream)
    assert jnp.allclose(out_stream, ref_out, atol=1e-5, rtol=1e-5)

    # Default bf16-MXU path (f32 accumulation): tolerance reflects the
    # intentional f32->bf16 cast of activations / GELU output before fc2.
    out_bf16 = mlp_block(x, w1, b1, w2, b2)
    jax.block_until_ready(out_bf16)
    assert out_bf16.shape == (batch, seq, input_dim)
    assert jnp.allclose(out_bf16, ref_out, atol=2e-2, rtol=2e-2)

    print("KERNEL_OK")
</pallas_src>

<mosaic_0001>
module attributes {stable_mosaic.version = 11 : i64} {
  func.func @_mlp_block_kernel(%arg0: i32, %arg1: i32, %arg2: memref<16x128xf32, #tpu.memory_space<vmem>>, %arg3: memref<128x256xf32, #tpu.memory_space<vmem>>, %arg4: memref<1x256xf32, #tpu.memory_space<vmem>>, %arg5: memref<256x128xf32, #tpu.memory_space<vmem>>, %arg6: memref<1x128xf32, #tpu.memory_space<vmem>>, %arg7: memref<16x128xf32, #tpu.memory_space<vmem>>, %arg8: memref<16x128xf32, #tpu.memory_space<vmem>>) attributes {dimension_semantics = [#tpu.dimension_semantics<parallel>, #tpu.dimension_semantics<arbitrary>], iteration_bounds = array<i64: 1, 1>, scalar_prefetch = 0 : i64, scratch_operands = 1 : i64, tpu.core_type = #tpu.core_type<tc>, window_params = [{transform_indices = @transform_0, window_bounds = array<i64: 16, 128>}, {transform_indices = @transform_1, window_bounds = array<i64: 128, 256>}, {transform_indices = @transform_2, window_bounds = array<i64: 1, 256>}, {transform_indices = @transform_3, window_bounds = array<i64: 256, 128>}, {pipeline_mode = #tpu.pipeline_mode<synchronous>, transform_indices = @transform_4, window_bounds = array<i64: 1, 128>}, {transform_indices = @transform_5, window_bounds = array<i64: 16, 128>}]} {
    %c0_i32 = arith.constant 0 : i32
    %0 = arith.cmpi eq, %arg1, %c0_i32 : i32
    %1 = arith.extui %0 : i1 to i32
    %c0_i32_0 = arith.constant 0 : i32
    %2 = arith.cmpi ne, %1, %c0_i32_0 : i32
    scf.if %2 {
      %cst_18 = arith.constant 0.000000e+00 : f32
      %25 = vector.broadcast %cst_18 : f32 to vector<16x128xf32>
      %c0_19 = arith.constant 0 : index
      %c0_20 = arith.constant 0 : index
      %26 = vector.load %arg8[%c0_19, %c0_20] : memref<16x128xf32, #tpu.memory_space<vmem>>, vector<16x128xf32>
      tpu.vector_store %arg8[%c0_19, %c0_20], %25 {strides = array<i32>} : memref<16x128xf32, #tpu.memory_space<vmem>>, vector<16x128xf32>,
    } else {
    }
    %c0 = arith.constant 0 : index
    %c0_1 = arith.constant 0 : index
    %3 = vector.load %arg2[%c0, %c0_1] : memref<16x128xf32, #tpu.memory_space<vmem>>, vector<16x128xf32>
    %c0_2 = arith.constant 0 : index
    %c0_3 = arith.constant 0 : index
    %4 = vector.load %arg3[%c0_2, %c0_3] : memref<128x256xf32, #tpu.memory_space<vmem>>, vector<128x256xf32>
    %cst = arith.constant dense<0.000000e+00> : vector<16x256xf32>
    %5 = tpu.matmul %3, %4, %cst {dimension_numbers = #tpu.dot_dimension_numbers<[1], [0], [0], [1], [0, 0, 1, 1], [], []>} : vector<16x128xf32>, vector<128x256xf32>, vector<16x256xf32> -> vector<16x256xf32>
    %c0_4 = arith.constant 0 : index
    %c0_5 = arith.constant 0 : index
    %6 = vector.load %arg4[%c0_4, %c0_5] : memref<1x256xf32, #tpu.memory_space<vmem>>, vector<1x256xf32>
    %7 = vector.broadcast %6 : vector<1x256xf32> to vector<16x256xf32>
    %8 = arith.addf %5, %7 : vector<16x256xf32>
    %cst_6 = arith.constant 5.000000e-01 : f32
    %9 = vector.broadcast %cst_6 : f32 to vector<16x256xf32>
    %10 = arith.mulf %9, %8 : vector<16x256xf32>
    %cst_7 = arith.constant 0.707106769 : f32
    %11 = vector.broadcast %cst_7 : f32 to vector<16x256xf32>
    %12 = arith.mulf %8, %11 : vector<16x256xf32>
    %13 = math.erf %12 : vector<16x256xf32>
    %cst_8 = arith.constant 1.000000e+00 : f32
    %14 = vector.broadcast %cst_8 : f32 to vector<16x256xf32>
    %15 = arith.addf %14, %13 : vector<16x256xf32>
    %16 = arith.mulf %10, %15 : vector<16x256xf32>
    %c0_9 = arith.constant 0 : index
    %c0_10 = arith.constant 0 : index
    %17 = vector.load %arg8[%c0_9, %c0_10] : memref<16x128xf32, #tpu.memory_space<vmem>>, vector<16x128xf32>
    %c0_11 = arith.constant 0 : index
    %c0_12 = arith.constant 0 : index
    %18 = vector.load %arg5[%c0_11, %c0_12] : memref<256x128xf32, #tpu.memory_space<vmem>>, vector<256x128xf32>
    %cst_13 = arith.constant dense<0.000000e+00> : vector<16x128xf32>
    %19 = tpu.matmul %16, %18, %cst_13 {dimension_numbers = #tpu.dot_dimension_numbers<[1], [0], [0], [1], [0, 0, 1, 1], [], []>} : vector<16x256xf32>, vector<256x128xf32>, vector<16x128xf32> -> vector<16x128xf32>
    %20 = arith.addf %17, %19 : vector<16x128xf32>
    %c0_14 = arith.constant 0 : index
    %c0_15 = arith.constant 0 : index
    %21 = vector.load %arg8[%c0_14, %c0_15] : memref<16x128xf32, #tpu.memory_space<vmem>>, vector<16x128xf32>
    tpu.vector_store %arg8[%c0_14, %c0_15], %20 {strides = array<i32>} : memref<16x128xf32, #tpu.memory_space<vmem>>, vector<16x128xf32>,
    %c0_i32_16 = arith.constant 0 : i32
    %22 = arith.cmpi eq, %arg1, %c0_i32_16 : i32
    %23 = arith.extui %22 : i1 to i32
    %c0_i32_17 = arith.constant 0 : i32
    %24 = arith.cmpi ne, %23, %c0_i32_17 : i32
    scf.if %24 {
      %c0_18 = arith.constant 0 : index
      %c0_19 = arith.constant 0 : index
      %25 = vector.load %arg8[%c0_18, %c0_19] : memref<16x128xf32, #tpu.memory_space<vmem>>, vector<16x128xf32>
      %c0_20 = arith.constant 0 : index
      %c0_21 = arith.constant 0 : index
      %26 = vector.load %arg6[%c0_20, %c0_21] : memref<1x128xf32, #tpu.memory_space<vmem>>, vector<1x128xf32>
      %27 = vector.broadcast %26 : vector<1x128xf32> to vector<16x128xf32>
      %28 = arith.addf %25, %27 : vector<16x128xf32>
      %c0_22 = arith.constant 0 : index
      %c0_23 = arith.constant 0 : index
      %29 = vector.load %arg7[%c0_22, %c0_23] : memref<16x128xf32, #tpu.memory_space<vmem>>, vector<16x128xf32>
      tpu.vector_store %arg7[%c0_22, %c0_23], %28 {strides = array<i32>} : memref<16x128xf32, #tpu.memory_space<vmem>>, vector<16x128xf32>,
    } else {
    }
    return
  }
  func.func @transform_0(%arg0: i32, %arg1: i32) -> (i32, i32) {
    %c0_i32 = arith.constant 0 : i32
    %c0_i32_0 = arith.constant 0 : i32
    return %arg0, %c0_i32 : i32, i32
  }
  func.func @transform_1(%arg0: i32, %arg1: i32) -> (i32, i32) {
    %c0_i32 = arith.constant 0 : i32
    %c0_i32_0 = arith.constant 0 : i32
    return %c0_i32, %arg1 : i32, i32
  }
  func.func @transform_2(%arg0: i32, %arg1: i32) -> (i32, i32) {
    %c0_i32 = arith.constant 0 : i32
    %c0_i32_0 = arith.constant 0 : i32
    return %c0_i32, %arg1 : i32, i32
  }
  func.func @transform_3(%arg0: i32, %arg1: i32) -> (i32, i32) {
    %c0_i32 = arith.constant 0 : i32
    %c0_i32_0 = arith.constant 0 : i32
    return %arg1, %c0_i32 : i32, i32
  }
  func.func @transform_4(%arg0: i32, %arg1: i32) -> (i32, i32) {
    %c0_i32 = arith.constant 0 : i32
    %c0_i32_0 = arith.constant 0 : i32
    %c0_i32_1 = arith.constant 0 : i32
    return %c0_i32, %c0_i32_0 : i32, i32
  }
  func.func @transform_5(%arg0: i32, %arg1: i32) -> (i32, i32) {
    %c0_i32 = arith.constant 0 : i32
    %c0_i32_0 = arith.constant 0 : i32
    return %arg0, %c0_i32 : i32, i32
  }
}

</mosaic_0001>

<llo_original>
// kernel: mlp_block.1
$region0: #{mlp_block.1}
  #allocation0 [shape = 'u32[]', space=smem, size = 0x4, offset = 0x4, fixed_abs, tag = 'smem constant byte address 0x4 - core index']
  #allocation1 [shape = 'u32[144,128]{1,0:T(1,128)}', space=vmem, size = 0x12000, scoped, tag = 'internal scratch']
  #allocation2 [shape = 'f32[16,128]{1,0:T(8,128)}', space=vmem, size = 0x2000, scoped, tag = 'scratch operand']
  %s0 = inlined_call_operand.vmem [shape: f32[16,128], index: 0, kind: input, shape index: {}]
  %s1 = inlined_call_operand.vmem [shape: f32[128,256], index: 1, kind: input, shape index: {}]
  %s2 = inlined_call_operand.vmem [shape: f32[1,256], index: 2, kind: input, shape index: {}]
  %s3 = inlined_call_operand.vmem [shape: f32[256,128], index: 3, kind: input, shape index: {}]
  %s4 = inlined_call_operand.vmem [shape: f32[1,128], index: 4, kind: input, shape index: {}]
  %s5 = inlined_call_operand.hbm [shape: f32[16,128], index: 5, kind: output, shape index: {}]
  %s6 = sld [smem:[#allocation0]]
  $region38: #{mlp_block.1} parent=0
    _
  %s8 = ssub.s32 1, %s6
  %s9 = scalar_select 0, %s8, %s6
  $region1: #{mlp_block.1} parent=0
    #allocation3 [shape = 'u8[8192]{0}', space=vmem, size = 0x2000, scoped, tag = 'output window, operand 0, single buffered']
    #allocation4 [shape = 's32[1]{0}', space=sflag, size = 0x4, scoped, tag = 'scoped memory for mlp_block.1']
    %10 = vsyncpa [#allocation4], 0
    // Predicated region
    $region2: #{mlp_block.1} parent=1 // pred_check
      _
    $region3: #{mlp_block.1} parent=1 // pred_check_branch
      %12 = sbr.rel (0) target = $region5
    $region4: #{mlp_block.1} parent=1 // pred_region
      _
    $region5: #{mlp_block.1} parent=1 // pred_fallthru
      _
    // Predicated region
    $region6: #{mlp_block.1} parent=1 // pred_check
      _
    $region7: #{mlp_block.1} parent=1 // pred_check_branch
      %14 = sbr.rel (0) target = $region9
    $region8: #{mlp_block.1} parent=1 // pred_region
      _
    $region9: #{mlp_block.1} parent=1 // pred_fallthru
      _
    // Predicated region
    $region10: #{mlp_block.1} parent=1 // pred_check
      _
    $region11: #{mlp_block.1} parent=1 // pred_check_branch
      %16 = sbr.rel (0) target = $region13
    $region12: #{mlp_block.1} parent=1 // pred_region
      _
    $region13: #{mlp_block.1} parent=1 // pred_fallthru
      _
    // Predicated region
    $region14: #{mlp_block.1} parent=1 // pred_check
      _
    $region15: #{mlp_block.1} parent=1 // pred_check_branch
      %18 = sbr.rel (0) target = $region17
    $region16: #{mlp_block.1} parent=1 // pred_region
      _
    $region17: #{mlp_block.1} parent=1 // pred_fallthru
      _
    // Predicated region
    $region18: #{mlp_block.1} parent=1 // pred_check
      _
    $region19: #{mlp_block.1} parent=1 // pred_check_branch
      %20 = sbr.rel (0) target = $region21
    $region20: #{mlp_block.1} parent=1 // pred_region
      _
    $region21: #{mlp_block.1} parent=1 // pred_fallthru
      _
    %p21 = scmp.eq.s32.totalorder 0, 0
    // Predicated region
    $region22: #{mlp_block.1} parent=1 // pred_check
      %p22 = pneg %p21
    $region23: #{mlp_block.1} parent=1 // pred_check_branch
      %24 = sbr.rel (%p22) target = $region25
    $region24: #{mlp_block.1} parent=1 // pred_region
      %25 = vst [vmem:[#allocation2] sm:$0xff] 0.0
      %26 = vst [vmem:[#allocation2 + $0x8] sm:$0xff] 0.0
    $region25: #{mlp_block.1} parent=1 // pred_fallthru
      _
    %v27 = vld [vmem:[%s0] sm:$0xff]
    %v28 = vld [vmem:[%s0 + $0x8] sm:$0xff]
    %v29 = vld [vmem:[%s1] sm:$0xff]
    %v30 = vld [vmem:[%s1 + $0x8] sm:$0xff]
    %v31 = vld [vmem:[%s1 + $0x10] sm:$0xff]
    %v32 = vld [vmem:[%s1 + $0x18] sm:$0xff]
    %v33 = vld [vmem:[%s1 + $0x20] sm:$0xff]
    %v34 = vld [vmem:[%s1 + $0x28] sm:$0xff]
    %v35 = vld [vmem:[%s1 + $0x30] sm:$0xff]
    %v36 = vld [vmem:[%s1 + $0x38] sm:$0xff]
    %v37 = vld [vmem:[%s1 + $0x40] sm:$0xff]
    %v38 = vld [vmem:[%s1 + $0x48] sm:$0xff]
    %v39 = vld [vmem:[%s1 + $0x50] sm:$0xff]
    %v40 = vld [vmem:[%s1 + $0x58] sm:$0xff]
    %v41 = vld [vmem:[%s1 + $0x60] sm:$0xff]
    %v42 = vld [vmem:[%s1 + $0x68] sm:$0xff]
    %v43 = vld [vmem:[%s1 + $0x70] sm:$0xff]
    %v44 = vld [vmem:[%s1 + $0x78] sm:$0xff]
    %v45 = vld [vmem:[%s1 + $0x80] sm:$0xff]
    %v46 = vld [vmem:[%s1 + $0x88] sm:$0xff]
    %v47 = vld [vmem:[%s1 + $0x90] sm:$0xff]
    %v48 = vld [vmem:[%s1 + $0x98] sm:$0xff]
    %v49 = vld [vmem:[%s1 + $0xa0] sm:$0xff]
    %v50 = vld [vmem:[%s1 + $0xa8] sm:$0xff]
    %v51 = vld [vmem:[%s1 + $0xb0] sm:$0xff]
    %v52 = vld [vmem:[%s1 + $0xb8] sm:$0xff]
    %v53 = vld [vmem:[%s1 + $0xc0] sm:$0xff]
    %v54 = vld [vmem:[%s1 + $0xc8] sm:$0xff]
    %v55 = vld [vmem:[%s1 + $0xd0] sm:$0xff]
    %v56 = vld [vmem:[%s1 + $0xd8] sm:$0xff]
    %v57 = vld [vmem:[%s1 + $0xe0] sm:$0xff]
    %v58 = vld [vmem:[%s1 + $0xe8] sm:$0xff]
    %v59 = vld [vmem:[%s1 + $0xf0] sm:$0xff]
    %v60 = vld [vmem:[%s1 + $0xf8] sm:$0xff]
    %v61 = vld [vmem:[%s2] sm:$0x3]
    %v63 = vlaneseq
    %v64 = vshrl.u32 %v63, 7
    %v65 = vsub.s32 0, %v64
    %v66 = vrot.slane %v61, %v65
    %v67 = vlaneseq
    %v68 = vshrl.u32 %v67, 7
    %v69 = vsub.s32 1, %v68
    %v70 = vrot.slane %v61, %v69
    %73 = vmatprep.subr.mxu0 %v30
    %74 = vmatpush1.msra.mxu0 %v29
    %75 = vmatprep.subr.mxu0 %v32
    %76 = vmatpush1.msra.mxu0 %v31
    %77 = vmatprep.subr.mxu0 %v34
    %78 = vmatpush1.msra.mxu0 %v33
    %79 = vmatprep.subr.mxu0 %v36
    %80 = vmatpush1.msra.mxu0 %v35
    %81 = vmatprep.subr.mxu0 %v38
    %82 = vmatpush1.msra.mxu0 %v37
    %83 = vmatprep.subr.mxu0 %v40
    %84 = vmatpush1.msra.mxu0 %v39
    %85 = vmatprep.subr.mxu0 %v42
    %86 = vmatpush1.msra.mxu0 %v41
    %87 = vmatprep.subr.mxu0 %v44
    %88 = vmatpush1.msra.mxu0 %v43
    %89 = vmatprep.subr.mxu0 %v46
    %90 = vmatpush1.msra.mxu0 %v45
    %91 = vmatprep.subr.mxu0 %v48
    %92 = vmatpush1.msra.mxu0 %v47
    %93 = vmatprep.subr.mxu0 %v50
    %94 = vmatpush1.msra.mxu0 %v49
    %95 = vmatprep.subr.mxu0 %v52
    %96 = vmatpush1.msra.mxu0 %v51
    %97 = vmatprep.subr.mxu0 %v54
    %98 = vmatpush1.msra.mxu0 %v53
    %99 = vmatprep.subr.mxu0 %v56
    %100 = vmatpush1.msra.mxu0 %v55
    %101 = vmatprep.subr.mxu0 %v58
    %102 = vmatpush1.msra.mxu0 %v57
    %103 = vmatprep.subr.mxu0 %v60
    %104 = vmatpush1.msra.mxu0 %v59
    %105 = vmatprep.subr.mxu0 0.0
    %106 = vmatpush1.msra.mxu0 0.0
    %107 = vmatprep.subr.mxu0 0.0
    %108 = vmatpush1.msra.mxu0 0.0
    %109 = vmatprep.subr.mxu0 0.0
    %110 = vmatpush1.msra.mxu0 0.0
    %111 = vmatprep.subr.mxu0 0.0
    %112 = vmatpush1.msra.mxu0 0.0
    %113 = vmatprep.subr.mxu0 0.0
    %114 = vmatpush1.msra.mxu0 0.0
    %115 = vmatprep.subr.mxu0 0.0
    %116 = vmatpush1.msra.mxu0 0.0
    %117 = vmatprep.subr.mxu0 0.0
    %118 = vmatpush1.msra.mxu0 0.0
    %119 = vmatprep.subr.mxu0 0.0
    %120 = vmatpush1.msra.mxu0 0.0
    %121 = vmatprep.subr.mxu0 0.0
    %122 = vmatpush1.msra.mxu0 0.0
    %123 = vmatprep.subr.mxu0 0.0
    %124 = vmatpush1.msra.mxu0 0.0
    %125 = vmatprep.subr.mxu0 0.0
    %126 = vmatpush1.msra.mxu0 0.0
    %127 = vmatprep.subr.mxu0 0.0
    %128 = vmatpush1.msra.mxu0 0.0
    %129 = vmatprep.subr.mxu0 0.0
    %130 = vmatpush1.msra.mxu0 0.0
    %131 = vmatprep.subr.mxu0 0.0
    %132 = vmatpush1.msra.mxu0 0.0
    %133 = vmatprep.subr.mxu0 0.0
    %134 = vmatpush1.msra.mxu0 0.0
    %135 = vmatprep.subr.mxu0 0.0
    %136 = vmatpush1.msra.mxu0 0.0
    %137 = vmatprep.mubr.f32.mxu0 0.0
    %138 = vmatmul.mubr.f32.gmra.mrb[0].mxu0 %v27
    %v139 = vpop.f32.mrb[0].mxu0
    %v140 = vadd.f32 %v66, %v139
    %v141 = vpop.f32.mrb[0].mxu0
    %v142 = vadd.f32 %v70, %v141
    %143 = vmatprep.mubr.f32.mxu0 0.0
    %144 = vmatmul.mubr.f32.gmra.mrb[0].mxu0 %v28
    %v145 = vpop.f32.mrb[0].mxu0
    %v146 = vadd.f32 %v66, %v145
    %v147 = vpop.f32.mrb[0].mxu0
    %v148 = vadd.f32 %v70, %v147
    %149 = vdwg.mxu0
    %v150 = vmul.f32 %v140, 0.5
    %v151 = vmul.f32 %v142, 0.5
    %v152 = vmul.f32 %v146, 0.5
    %v153 = vmul.f32 %v148, 0.5
    %v154 = vmul.f32 %v140, 0.70710677
    %v155 = vmul.f32 %v142, 0.70710677
    %v156 = vmul.f32 %v146, 0.70710677
    %v157 = vmul.f32 %v148, 0.70710677
    %v158 = verf.f32.pop %v154
    %v159 = verf.f32.pop %v155
    %v160 = verf.f32.pop %v156
    %v161 = verf.f32.pop %v157
    %v162 = vadd.f32 %v158, 1.0
    %v163 = vadd.f32 %v159, 1.0
    %v164 = vadd.f32 %v160, 1.0
    %v165 = vadd.f32 %v161, 1.0
    %v166 = vmul.f32 %v150, %v162
    %v167 = vmul.f32 %v151, %v163
    %v168 = vmul.f32 %v152, %v164
    %v169 = vmul.f32 %v153, %v165
    %v170 = vld [vmem:[#allocation2] sm:$0xff]
    %v171 = vld [vmem:[#allocation2 + $0x8] sm:$0xff]
    %v172 = vld [vmem:[%s3] sm:$0xff]
    %v173 = vld [vmem:[%s3 + $0x8] sm:$0xff]
    %v174 = vld [vmem:[%s3 + $0x10] sm:$0xff]
    %v175 = vld [vmem:[%s3 + $0x18] sm:$0xff]
    %v176 = vld [vmem:[%s3 + $0x20] sm:$0xff]
    %v177 = vld [vmem:[%s3 + $0x28] sm:$0xff]
    %v178 = vld [vmem:[%s3 + $0x30] sm:$0xff]
    %v179 = vld [vmem:[%s3 + $0x38] sm:$0xff]
    %v180 = vld [vmem:[%s3 + $0x40] sm:$0xff]
    %v181 = vld [vmem:[%s3 + $0x48] sm:$0xff]
    %v182 = vld [vmem:[%s3 + $0x50] sm:$0xff]
    %v183 = vld [vmem:[%s3 + $0x58] sm:$0xff]
    %v184 = vld [vmem:[%s3 + $0x60] sm:$0xff]
    %v185 = vld [vmem:[%s3 + $0x68] sm:$0xff]
    %v186 = vld [vmem:[%s3 + $0x70] sm:$0xff]
    %v187 = vld [vmem:[%s3 + $0x78] sm:$0xff]
    %v188 = vld [vmem:[%s3 + $0x80] sm:$0xff]
    %v189 = vld [vmem:[%s3 + $0x88] sm:$0xff]
    %v190 = vld [vmem:[%s3 + $0x90] sm:$0xff]
    %v191 = vld [vmem:[%s3 + $0x98] sm:$0xff]
    %v192 = vld [vmem:[%s3 + $0xa0] sm:$0xff]
    %v193 = vld [vmem:[%s3 + $0xa8] sm:$0xff]
    %v194 = vld [vmem:[%s3 + $0xb0] sm:$0xff]
    %v195 = vld [vmem:[%s3 + $0xb8] sm:$0xff]
    %v196 = vld [vmem:[%s3 + $0xc0] sm:$0xff]
    %v197 = vld [vmem:[%s3 + $0xc8] sm:$0xff]
    %v198 = vld [vmem:[%s3 + $0xd0] sm:$0xff]
    %v199 = vld [vmem:[%s3 + $0xd8] sm:$0xff]
    %v200 = vld [vmem:[%s3 + $0xe0] sm:$0xff]
    %v201 = vld [vmem:[%s3 + $0xe8] sm:$0xff]
    %v202 = vld [vmem:[%s3 + $0xf0] sm:$0xff]
    %v203 = vld [vmem:[%s3 + $0xf8] sm:$0xff]
    %204 = vmatprep.subr.mxu0 0.0
    %205 = vmatpush1.msra.mxu0 %v172
    %206 = vmatprep.subr.mxu0 0.0
    %207 = vmatpush1.msra.mxu0 %v173
    %208 = vmatprep.subr.mxu0 0.0
    %209 = vmatpush1.msra.mxu0 %v174
    %210 = vmatprep.subr.mxu0 0.0
    %211 = vmatpush1.msra.mxu0 %v175
    %212 = vmatprep.subr.mxu0 0.0
    %213 = vmatpush1.msra.mxu0 %v176
    %214 = vmatprep.subr.mxu0 0.0
    %215 = vmatpush1.msra.mxu0 %v177
    %216 = vmatprep.subr.mxu0 0.0
    %217 = vmatpush1.msra.mxu0 %v178
    %218 = vmatprep.subr.mxu0 0.0
    %219 = vmatpush1.msra.mxu0 %v179
    %220 = vmatprep.subr.mxu0 0.0
    %221 = vmatpush1.msra.mxu0 %v180
    %222 = vmatprep.subr.mxu0 0.0
    %223 = vmatpush1.msra.mxu0 %v181
    %224 = vmatprep.subr.mxu0 0.0
    %225 = vmatpush1.msra.mxu0 %v182
    %226 = vmatprep.subr.mxu0 0.0
    %227 = vmatpush1.msra.mxu0 %v183
    %228 = vmatprep.subr.mxu0 0.0
    %229 = vmatpush1.msra.mxu0 %v184
    %230 = vmatprep.subr.mxu0 0.0
    %231 = vmatpush1.msra.mxu0 %v185
    %232 = vmatprep.subr.mxu0 0.0
    %233 = vmatpush1.msra.mxu0 %v186
    %234 = vmatprep.subr.mxu0 0.0
    %235 = vmatpush1.msra.mxu0 %v187
    %236 = vmatprep.subr.mxu0 0.0
    %237 = vmatpush1.msra.mxu0 %v188
    %238 = vmatprep.subr.mxu0 0.0
    %239 = vmatpush1.msra.mxu0 %v189
    %240 = vmatprep.subr.mxu0 0.0
    %241 = vmatpush1.msra.mxu0 %v190
    %242 = vmatprep.subr.mxu0 0.0
    %243 = vmatpush1.msra.mxu0 %v191
    %244 = vmatprep.subr.mxu0 0.0
    %245 = vmatpush1.msra.mxu0 %v192
    %246 = vmatprep.subr.mxu0 0.0
    %247 = vmatpush1.msra.mxu0 %v193
    %248 = vmatprep.subr.mxu0 0.0
    %249 = vmatpush1.msra.mxu0 %v194
    %250 = vmatprep.subr.mxu0 0.0
    %251 = vmatpush1.msra.mxu0 %v195
    %252 = vmatprep.subr.mxu0 0.0
    %253 = vmatpush1.msra.mxu0 %v196
    %254 = vmatprep.subr.mxu0 0.0
    %255 = vmatpush1.msra.mxu0 %v197
    %256 = vmatprep.subr.mxu0 0.0
    %257 = vmatpush1.msra.mxu0 %v198
    %258 = vmatprep.subr.mxu0 0.0
    %259 = vmatpush1.msra.mxu0 %v199
    %260 = vmatprep.subr.mxu0 0.0
    %261 = vmatpush1.msra.mxu0 %v200
    %262 = vmatprep.subr.mxu0 0.0
    %263 = vmatpush1.msra.mxu0 %v201
    %264 = vmatprep.subr.mxu0 0.0
    %265 = vmatpush1.msra.mxu0 %v202
    %266 = vmatprep.subr.mxu0 0.0
    %267 = vmatpush1.msra.mxu0 %v203
    %268 = vmatprep.mubr.f32.mxu0 %v167
    %269 = vmatmul.mubr.f32.gmra.mrb[0].mxu0 %v166
    %v270 = vpop.f32.mrb[0].mxu0
    %v271 = vadd.f32 0.0, %v270
    %v272 = vpop.f32.mrb[0].mxu0
    %273 = vmatprep.mubr.f32.mxu0 %v169
    %274 = vmatmul.mubr.f32.gmra.mrb[0].mxu0 %v168
    %v275 = vpop.f32.mrb[0].mxu0
    %v276 = vadd.f32 0.0, %v275
    %v277 = vpop.f32.mrb[0].mxu0
    %278 = vdwg.mxu0
    %v279 = vadd.f32 %v170, %v271
    %v280 = vadd.f32 %v171, %v276
    %281 = vst [vmem:[#allocation2] sm:$0xff] %v279
    %282 = vst [vmem:[#allocation2 + $0x8] sm:$0xff] %v280
    // Predicated region
    $region26: #{mlp_block.1} parent=1 // pred_check
      %p283 = pneg %p21
    $region27: #{mlp_block.1} parent=1 // pred_check_branch
      %285 = sbr.rel (%p283) target = $region29
    $region28: #{mlp_block.1} parent=1 // pred_region
      %v286 = vld [vmem:[#allocation2] sm:$0xff]
      %v287 = vld [vmem:[#allocation2 + $0x8] sm:$0xff]
      %v288 = vld [vmem:[%s4] sm:$0x1]
      %v290 = vlaneseq
      %v291 = vshrl.u32 %v290, 7
      %v292 = vsub.s32 0, %v291
      %v293 = vrot.slane %v288, %v292
      %v295 = vadd.f32 %v286, %v293
      %v296 = vadd.f32 %v287, %v293
      %297 = vst [vmem:[#allocation3] sm:$0xff] %v295
      %298 = vst [vmem:[#allocation3 + $0x8] sm:$0xff] %v296
    $region29: #{mlp_block.1} parent=1 // pred_fallthru
      _
    // Predicated region
    $region30: #{mlp_block.1} parent=1 // pred_check
      _
    $region31: #{mlp_block.1} parent=1 // pred_check_branch
      %300 = sbr.rel (0) target = $region33
    $region32: #{mlp_block.1} parent=1 // pred_region
      %s302 = ssub.s32 256, 256
      %303 = vsyncadd [#allocation4], %s302
      %s304 = sshll.u32 [#allocation3], 4
      %s305 = int_to_ptr.vmem [resolvable:$true] %s304
      %310 = dma.vmem_to_hbm [thread:$0]  %s305, 256, %s5, [#allocation4], 128, 128, 8
    $region33: #{mlp_block.1} parent=1 // pred_fallthru
      _
    // Predicated region
    $region34: #{mlp_block.1} parent=1 // pred_check
      _
    $region35: #{mlp_block.1} parent=1 // pred_check_branch
      %312 = sbr.rel (0) target = $region37
    $region36: #{mlp_block.1} parent=1 // pred_region
      %313 = dma.done [#allocation4], 256
    $region37: #{mlp_block.1} parent=1 // pred_fallthru
      _
    %314 = vsyncpa [#allocation4], 1

</llo_original>
